<compile_context>
chip_gen: v7x
topology: tpu7x:2x2x1
jax: 0.10.0
libtpu: 0.0.40
codegen_flags: <defaults>
</compile_context>

<pallas_src>
import jax
import jax.numpy as jnp
from jax.experimental import pallas as pl
from jax.experimental.pallas import tpu as pltpu


def region_branch_kernel(maskT_ref, x_ref, w1T_ref, b1_ref, w2T_ref, b2_ref,
                         o_ref, acc_ref):
    # maskT_ref: (S, R)        region-membership mask * 1/(rs*rs)
    # x_ref:     (1, TC, S)    one batch element, one channel tile, full spatial
    # w1T_ref:   (Hd, TC)      first Linear, transposed, channel tile
    # b1_ref:    (Hd, 1)
    # w2T_ref:   (K, Hd)       second Linear, transposed
    # b2_ref:    (K, 1)
    # o_ref:     (1, K, R)
    # acc_ref:   (Hd, R)       f32 accumulator over channel tiles
    k = pl.program_id(1)

    @pl.when(k == 0)
    def _init():
        acc_ref[...] = jnp.zeros_like(acc_ref)

    tile = x_ref[0].astype(jnp.float32)                        # (TC, S)
    # Region average-pool on the MXU: (TC, S) @ (S, R) -> (TC, R)
    pooled_t = jnp.dot(tile, maskT_ref[...],
                       preferred_element_type=jnp.float32)
    # Partial first Linear for this channel tile: (Hd, TC) @ (TC, R) -> (Hd, R)
    acc_ref[...] += jnp.dot(w1T_ref[...], pooled_t,
                            preferred_element_type=jnp.float32)

    @pl.when(k == pl.num_programs(1) - 1)
    def _finish():
        h = jnp.maximum(acc_ref[...] + b1_ref[...], 0.0)       # (Hd, R)  ReLU
        out_t = jnp.dot(w2T_ref[...], h,
                        preferred_element_type=jnp.float32) + b2_ref[...]
        o_ref[0] = out_t.astype(o_ref.dtype)                   # (K, R)


def _pick_channel_tile(c, s_lanes, elem_bytes, target_bytes=4 << 20):
    """Largest channel tile that (a) keeps one x block around target_bytes and
    (b) satisfies the BlockSpec lane constraint for the (Hd, TC) weight tile
    (TC % 128 == 0) — or the full channel dim as a fallback."""
    if c % 128 != 0:
        return c                                  # full-dim block (always legal)
    tc = (target_bytes // (s_lanes * elem_bytes)) // 128 * 128
    tc = max(128, min(int(tc), c))
    while c % tc:
        tc -= 128
    return max(tc, 128)


def region_branch_forward(x, w1, b1, w2, b2, num_regions=4):
    """x: (bs, c, W, H) NCHW.  w1: (c, hidden), b1: (hidden,), w2: (hidden, K),
    b2: (K,).  Returns (bs, num_classes, num_regions)."""
    bs, c, W, H = x.shape
    rs = W // (num_regions // 2)          # region_size, as in the torch module
    nb_w, nb_h = W // rs, H // rs
    n_reg = nb_w * nb_h                   # == num_regions for the 2x2 case
    S = W * H
    hidden = w1.shape[1]
    k_cls = w2.shape[1]

    # Region-membership mask in torch-unfold order (W blocks outer, H inner),
    # with the average-pool 1/(rs*rs) scale folded in.
    w_idx = jnp.arange(W)[:, None]
    h_idx = jnp.arange(H)[None, :]
    region_of = (w_idx // rs) * nb_h + (h_idx // rs)           # (W, H)
    mask_t = (region_of.reshape(S, 1) == jnp.arange(n_reg)[None, :])
    mask_t = mask_t.astype(jnp.float32) / float(rs * rs)       # (S, n_reg)

    x_flat = x.reshape(bs, c, S)          # free view (contiguous minor dims)
    w1_t = w1.T                           # (hidden, c)   tiny one-time re-layout
    w2_t = w2.T                           # (k_cls, hidden)
    b1_c = b1.reshape(hidden, 1)
    b2_c = b2.reshape(k_cls, 1)

    ebytes = jnp.dtype(x.dtype).itemsize
    s_lanes = ((S + 127) // 128) * 128
    tc = _pick_channel_tile(c, s_lanes, ebytes)
    num_k = c // tc
    grid = (bs, num_k)                    # reduction (channel) axis last

    cost = pl.CostEstimate(
        flops=2 * bs * (c * S * n_reg + n_reg * c * hidden + n_reg * hidden * k_cls),
        transcendentals=0,
        bytes_accessed=int(
            x_flat.size * ebytes
            + sum(int(a.size) * a.dtype.itemsize for a in (w1, b1, w2, b2, mask_t))
            + bs * k_cls * n_reg * 4),
    )

    out = pl.pallas_call(
        region_branch_kernel,
        out_shape=jax.ShapeDtypeStruct((bs, k_cls, n_reg), jnp.float32),
        grid=grid,
        in_specs=[
            pl.BlockSpec((S, n_reg), lambda b, k: (0, 0)),          # mask_t
            pl.BlockSpec((1, tc, S), lambda b, k: (b, k, 0)),       # x
            pl.BlockSpec((hidden, tc), lambda b, k: (0, k)),        # w1^T
            pl.BlockSpec((hidden, 1), lambda b, k: (0, 0)),         # b1
            pl.BlockSpec((k_cls, hidden), lambda b, k: (0, 0)),     # w2^T
            pl.BlockSpec((k_cls, 1), lambda b, k: (0, 0)),          # b2
        ],
        out_specs=pl.BlockSpec((1, k_cls, n_reg), lambda b, k: (b, 0, 0)),
        scratch_shapes=[pltpu.VMEM((hidden, n_reg), jnp.float32)],
        compiler_params=pltpu.CompilerParams(
            dimension_semantics=("parallel", "arbitrary")),
        cost_estimate=cost,
    )(mask_t, x_flat, w1_t, b1_c, w2_t, b2_c)

    return out                            # (bs, num_classes, num_regions)


def reference_forward(x, w1, b1, w2, b2, num_regions=4):
    """Pure-JAX reference mirroring the PyTorch forward."""
    bs, c, W, H = x.shape
    rs = W // (num_regions // 2)
    xr = x.reshape(bs, c, 2, rs, 2, rs).transpose(0, 2, 4, 1, 3, 5)
    patches = xr.reshape(bs, num_regions, c, rs, rs)
    outs = []
    for i in range(num_regions):
        f = patches[:, i].mean(axis=(2, 3))              # (bs, c)
        h = jnp.maximum(f @ w1 + b1, 0.0)
        outs.append(h @ w2 + b2)
    return jnp.stack(outs, axis=2)                       # (bs, K, num_regions)


if __name__ == "__main__":
    # Small shapes consistent with the module (inputdim=2048, 14x14 scaled down):
    bs, c, W, H = 2, 64, 16, 16
    num_regions, num_classes, reduction_factor = 4, 8, 8
    hidden = c // reduction_factor

    key = jax.random.PRNGKey(0)
    kx, kw1, kb1, kw2, kb2 = jax.random.split(key, 5)

    x = jax.random.normal(kx, (bs, c, W, H), dtype=jnp.float32)
    # shared region_net weights (deterministic synthetic init)
    w1 = jax.random.normal(kw1, (c, hidden), dtype=jnp.float32) * 0.05
    b1 = jax.random.normal(kb1, (hidden,), dtype=jnp.float32) * 0.05
    w2 = jax.random.normal(kw2, (hidden, num_classes), dtype=jnp.float32) * 0.05
    b2 = jax.random.normal(kb2, (num_classes,), dtype=jnp.float32) * 0.05

    out = region_branch_forward(x, w1, b1, w2, b2, num_regions=num_regions)
    out = jax.block_until_ready(out)

    ref = reference_forward(x, w1, b1, w2, b2, num_regions=num_regions)
    assert out.shape == (bs, num_classes, num_regions), out.shape
    assert jnp.allclose(out, ref, atol=1e-4, rtol=1e-4), "mismatch vs reference"

    print("KERNEL_OK")
</pallas_src>

<mosaic_0001>
module attributes {stable_mosaic.version = 11 : i64} {
  func.func @region_branch_kernel(%arg0: i32, %arg1: i32, %arg2: memref<256x4xf32, #tpu.memory_space<vmem>>, %arg3: memref<1x64x256xf32, #tpu.memory_space<vmem>>, %arg4: memref<8x64xf32, #tpu.memory_space<vmem>>, %arg5: memref<8x1xf32, #tpu.memory_space<vmem>>, %arg6: memref<8x8xf32, #tpu.memory_space<vmem>>, %arg7: memref<8x1xf32, #tpu.memory_space<vmem>>, %arg8: memref<1x8x4xf32, #tpu.memory_space<vmem>>, %arg9: memref<8x4xf32, #tpu.memory_space<vmem>>) attributes {dimension_semantics = [#tpu.dimension_semantics<parallel>, #tpu.dimension_semantics<arbitrary>], iteration_bounds = array<i64: 2, 1>, scalar_prefetch = 0 : i64, scratch_operands = 1 : i64, tpu.core_type = #tpu.core_type<tc>, window_params = [{pipeline_mode = #tpu.pipeline_mode<synchronous>, transform_indices = @transform_0, window_bounds = array<i64: 256, 4>}, {transform_indices = @transform_1, window_bounds = array<i64: 1, 64, 256>}, {transform_indices = @transform_2, window_bounds = array<i64: 8, 64>}, {pipeline_mode = #tpu.pipeline_mode<synchronous>, transform_indices = @transform_3, window_bounds = array<i64: 8, 1>}, {pipeline_mode = #tpu.pipeline_mode<synchronous>, transform_indices = @transform_4, window_bounds = array<i64: 8, 8>}, {pipeline_mode = #tpu.pipeline_mode<synchronous>, transform_indices = @transform_5, window_bounds = array<i64: 8, 1>}, {transform_indices = @transform_6, window_bounds = array<i64: 1, 8, 4>}]} {
    %c0_i32 = arith.constant 0 : i32
    %0 = arith.cmpi eq, %arg1, %c0_i32 : i32
    %1 = arith.extui %0 : i1 to i32
    %c0_i32_0 = arith.constant 0 : i32
    %2 = arith.cmpi ne, %1, %c0_i32_0 : i32
    scf.if %2 {
      %cst_14 = arith.constant 0.000000e+00 : f32
      %15 = vector.broadcast %cst_14 : f32 to vector<8x4xf32>
      %c0_15 = arith.constant 0 : index
      %c0_16 = arith.constant 0 : index
      %16 = vector.load %arg9[%c0_15, %c0_16] : memref<8x4xf32, #tpu.memory_space<vmem>>, vector<8x4xf32>
      tpu.vector_store %arg9[%c0_15, %c0_16], %15 {strides = array<i32>} : memref<8x4xf32, #tpu.memory_space<vmem>>, vector<8x4xf32>,
    } else {
    }
    %c0 = arith.constant 0 : index
    %c0_1 = arith.constant 0 : index
    %c0_2 = arith.constant 0 : index
    %3 = vector.load %arg3[%c0, %c0_1, %c0_2] : memref<1x64x256xf32, #tpu.memory_space<vmem>>, vector<1x64x256xf32>
    %4 = vector.shape_cast %3 : vector<1x64x256xf32> to vector<64x256xf32>
    %c0_3 = arith.constant 0 : index
    %c0_4 = arith.constant 0 : index
    %5 = vector.load %arg2[%c0_3, %c0_4] : memref<256x4xf32, #tpu.memory_space<vmem>>, vector<256x4xf32>
    %cst = arith.constant dense<0.000000e+00> : vector<64x4xf32>
    %6 = tpu.matmul %4, %5, %cst {dimension_numbers = #tpu.dot_dimension_numbers<[1], [0], [0], [1], [0, 0, 1, 1], [], []>} : vector<64x256xf32>, vector<256x4xf32>, vector<64x4xf32> -> vector<64x4xf32>
    %c0_5 = arith.constant 0 : index
    %c0_6 = arith.constant 0 : index
    %7 = vector.load %arg9[%c0_5, %c0_6] : memref<8x4xf32, #tpu.memory_space<vmem>>, vector<8x4xf32>
    %c0_7 = arith.constant 0 : index
    %c0_8 = arith.constant 0 : index
    %8 = vector.load %arg4[%c0_7, %c0_8] : memref<8x64xf32, #tpu.memory_space<vmem>>, vector<8x64xf32>
    %cst_9 = arith.constant dense<0.000000e+00> : vector<8x4xf32>
    %9 = tpu.matmul %8, %6, %cst_9 {dimension_numbers = #tpu.dot_dimension_numbers<[1], [0], [0], [1], [0, 0, 1, 1], [], []>} : vector<8x64xf32>, vector<64x4xf32>, vector<8x4xf32> -> vector<8x4xf32>
    %10 = arith.addf %7, %9 : vector<8x4xf32>
    %c0_10 = arith.constant 0 : index
    %c0_11 = arith.constant 0 : index
    %11 = vector.load %arg9[%c0_10, %c0_11] : memref<8x4xf32, #tpu.memory_space<vmem>>, vector<8x4xf32>
    tpu.vector_store %arg9[%c0_10, %c0_11], %10 {strides = array<i32>} : memref<8x4xf32, #tpu.memory_space<vmem>>, vector<8x4xf32>,
    %c0_i32_12 = arith.constant 0 : i32
    %12 = arith.cmpi eq, %arg1, %c0_i32_12 : i32
    %13 = arith.extui %12 : i1 to i32
    %c0_i32_13 = arith.constant 0 : i32
    %14 = arith.cmpi ne, %13, %c0_i32_13 : i32
    scf.if %14 {
      %c0_14 = arith.constant 0 : index
      %c0_15 = arith.constant 0 : index
      %15 = vector.load %arg9[%c0_14, %c0_15] : memref<8x4xf32, #tpu.memory_space<vmem>>, vector<8x4xf32>
      %c0_16 = arith.constant 0 : index
      %c0_17 = arith.constant 0 : index
      %16 = vector.load %arg5[%c0_16, %c0_17] : memref<8x1xf32, #tpu.memory_space<vmem>>, vector<8x1xf32>
      %17 = vector.broadcast %16 : vector<8x1xf32> to vector<8x4xf32>
      %18 = arith.addf %15, %17 : vector<8x4xf32>
      %cst_18 = arith.constant 0.000000e+00 : f32
      %19 = vector.broadcast %cst_18 : f32 to vector<8x4xf32>
      %20 = arith.maximumf %18, %19 : vector<8x4xf32>
      %c0_19 = arith.constant 0 : index
      %c0_20 = arith.constant 0 : index
      %21 = vector.load %arg6[%c0_19, %c0_20] : memref<8x8xf32, #tpu.memory_space<vmem>>, vector<8x8xf32>
      %cst_21 = arith.constant dense<0.000000e+00> : vector<8x4xf32>
      %22 = tpu.matmul %21, %20, %cst_21 {dimension_numbers = #tpu.dot_dimension_numbers<[1], [0], [0], [1], [0, 0, 1, 1], [], []>} : vector<8x8xf32>, vector<8x4xf32>, vector<8x4xf32> -> vector<8x4xf32>
      %c0_22 = arith.constant 0 : index
      %c0_23 = arith.constant 0 : index
      %23 = vector.load %arg7[%c0_22, %c0_23] : memref<8x1xf32, #tpu.memory_space<vmem>>, vector<8x1xf32>
      %24 = vector.broadcast %23 : vector<8x1xf32> to vector<8x4xf32>
      %25 = arith.addf %22, %24 : vector<8x4xf32>
      %c0_24 = arith.constant 0 : index
      %c0_25 = arith.constant 0 : index
      %c0_26 = arith.constant 0 : index
      %26 = vector.load %arg8[%c0_24, %c0_25, %c0_26] : memref<1x8x4xf32, #tpu.memory_space<vmem>>, vector<1x8x4xf32>
      %27 = vector.shape_cast %26 : vector<1x8x4xf32> to vector<8x4xf32>
      %28 = vector.shape_cast %25 : vector<8x4xf32> to vector<1x8x4xf32>
      tpu.vector_store %arg8[%c0_24, %c0_25, %c0_26], %28 {strides = array<i32>} : memref<1x8x4xf32, #tpu.memory_space<vmem>>, vector<1x8x4xf32>,
    } else {
    }
    return
  }
  func.func @transform_0(%arg0: i32, %arg1: i32) -> (i32, i32) {
    %c0_i32 = arith.constant 0 : i32
    %c0_i32_0 = arith.constant 0 : i32
    %c0_i32_1 = arith.constant 0 : i32
    return %c0_i32, %c0_i32_0 : i32, i32
  }
  func.func @transform_1(%arg0: i32, %arg1: i32) -> (i32, i32, i32) {
    %c0_i32 = arith.constant 0 : i32
    %c0_i32_0 = arith.constant 0 : i32
    return %arg0, %arg1, %c0_i32 : i32, i32, i32
  }
  func.func @transform_2(%arg0: i32, %arg1: i32) -> (i32, i32) {
    %c0_i32 = arith.constant 0 : i32
    %c0_i32_0 = arith.constant 0 : i32
    return %c0_i32, %arg1 : i32, i32
  }
  func.func @transform_3(%arg0: i32, %arg1: i32) -> (i32, i32) {
    %c0_i32 = arith.constant 0 : i32
    %c0_i32_0 = arith.constant 0 : i32
    %c0_i32_1 = arith.constant 0 : i32
    return %c0_i32, %c0_i32_0 : i32, i32
  }
  func.func @transform_4(%arg0: i32, %arg1: i32) -> (i32, i32) {
    %c0_i32 = arith.constant 0 : i32
    %c0_i32_0 = arith.constant 0 : i32
    %c0_i32_1 = arith.constant 0 : i32
    return %c0_i32, %c0_i32_0 : i32, i32
  }
  func.func @transform_5(%arg0: i32, %arg1: i32) -> (i32, i32) {
    %c0_i32 = arith.constant 0 : i32
    %c0_i32_0 = arith.constant 0 : i32
    %c0_i32_1 = arith.constant 0 : i32
    return %c0_i32, %c0_i32_0 : i32, i32
  }
  func.func @transform_6(%arg0: i32, %arg1: i32) -> (i32, i32, i32) {
    %c0_i32 = arith.constant 0 : i32
    %c0_i32_0 = arith.constant 0 : i32
    %c0_i32_1 = arith.constant 0 : i32
    return %arg0, %c0_i32, %c0_i32_0 : i32, i32, i32
  }
}

</mosaic_0001>

<llo_original>
// kernel: tpu_custom_call.1
$region0: #{tpu_custom_call.1}
  #allocation0 [shape = 'u32[]', space=smem, size = 0x4, offset = 0x4, fixed_abs, tag = 'smem constant byte address 0x4 - core index']
  #allocation1 [shape = 'u32[144,128]{1,0:T(1,128)}', space=vmem, size = 0x12000, scoped, tag = 'internal scratch']
  #allocation2 [shape = 'f32[8,4]{1,0:T(8,128)}', space=vmem, size = 0x1000, scoped, tag = 'scratch operand']
  %s0 = inlined_call_operand.vmem [shape: f32[256,4], index: 0, kind: input, shape index: {}]
  %s1 = inlined_call_operand.vmem [shape: f32[2,64,256], index: 1, kind: input, shape index: {}]
  %s2 = inlined_call_operand.vmem [shape: f32[8,64], index: 2, kind: input, shape index: {}]
  %s3 = inlined_call_operand.vmem [shape: f32[8,1], index: 3, kind: input, shape index: {}]
  %s4 = inlined_call_operand.vmem [shape: f32[8,8], index: 4, kind: input, shape index: {}]
  %s5 = inlined_call_operand.vmem [shape: f32[8,1], index: 5, kind: input, shape index: {}]
  %s6 = inlined_call_operand.vmem [shape: f32[2,8,4], index: 6, kind: output, shape index: {}]
  %s7 = sld [smem:[#allocation0]]
  $region65: #{tpu_custom_call.1} parent=0
    _
  %s9 = ssub.s32 1, %s7
  %s10 = scalar_select 0, %s9, %s7
  loop: start=0, step=1, limit=4
  $region2: #{tpu_custom_call.1} parent=0 // loop_pre_header
    _
  $region3: #{tpu_custom_call.1} parent=0 // loop_header
    %s12 = sphi 0, %s16
    %p13 = scmp.ge.s32.totalorder %s12, 4
    %s19 = sphi 0, %s31
    %s20 = sphi 0, %s27
    %s21 = sphi 0, %s19
    %s22 = sphi 0, %s20
    %s23 = sphi 0, %s21
    %s24 = sphi 0, %s22
    %s32 = sphi 0, %s32
    %s34 = sphi 0, %s32
    %s35 = sphi 0, %s34
    %s49 = sphi 0, %s35
    %s57 = sphi 0, %s59
    %s60 = sphi 0, %s57
    %s61 = sphi 0, %s60
    %s77 = sphi 0, %s61
    %s83 = sphi 0, %s85
    %s86 = sphi 0, %s83
    %s87 = sphi 0, %s86
    %s103 = sphi 0, %s87
    %s107 = sphi 0, %s107
    %s109 = sphi 0, %s107
    %s110 = sphi 0, %s109
    %s124 = sphi 0, %s110
    %s128 = sphi 0, %s128
    %s130 = sphi 0, %s128
    %s131 = sphi 0, %s130
    %s145 = sphi 0, %s131
    %s149 = sphi 0, %s149
    %s151 = sphi 0, %s149
    %s152 = sphi 0, %s151
    %s166 = sphi 0, %s152
    %s172 = sphi 0, %s174
    %s175 = sphi 0, %s172
    %s176 = sphi 0, %s175
    %s192 = sphi 0, %s176
  $region4: #{tpu_custom_call.1} parent=0 // loop_header_branch
    %15 = sbr.rel (%p13) target = $region8
  $region5: #{tpu_custom_call.1} parent=0 // loop_body
    %s17 = ssub.s32 %s12, 1
    %s18 = ssub.s32 %s12, 2
    %s25 = sadd.s32 1, %s20
    %p26 = scmp.ge.s32.totalorder %s25, 1
    %s27 = scalar_select %p26, 0, %s25
    %s28 = sadd.s32 1, %s19
    %s29 = scalar_select %p26, %s28, %s19
    %p30 = scmp.ge.s32.totalorder %s29, 2
    %s31 = scalar_select %p30, 0, %s29
    %s33 = sadd.s32 %s32, 1
    %p36 = scmp.eq.s32.totalorder %s12, 1
    %p37 = scmp.ne.s32.totalorder %s32, %s34
    %p38 = scmp.eq.s32.totalorder %s12, 0
    %p39 = por %p37, %p38
    %p40 = scmp.ne.s32.totalorder %s32, %s34
    %p41 = scmp.eq.s32.totalorder %s17, 1
    %p42 = por %p40, %p41
    %p43 = scmp.ne.s32.totalorder %s34, %s35
    %p44 = scmp.eq.s32.totalorder %s17, 0
    %p45 = por %p43, %p44
    %p46 = scmp.ne.s32.totalorder %s34, %s35
    %p47 = scmp.eq.s32.totalorder %s18, 1
    %p48 = por %p46, %p47
    %p50 = scmp.ne.s32.totalorder %s35, %s49
    %p51 = scmp.eq.s32.totalorder %s18, 0
    %p52 = por %p50, %p51
    %s53 = ssub.s32 %s19, %s31
    %s54 = ssub.s32 %s20, %s27
    %s55 = sor.u32 %s53, %s54
    %p56 = scmp.eq.s32.totalorder %s55, 0
    %s58 = sadd.s32 %s57, 1
    %s59 = scalar_select %p56, %s57, %s58
    %p62 = pneg %p56
    %p63 = scmp.eq.s32.totalorder %s12, 1
    %p64 = por %p62, %p63
    %p65 = scmp.ne.s32.totalorder %s57, %s60
    %p66 = scmp.eq.s32.totalorder %s12, 0
    %p67 = por %p65, %p66
    %p68 = scmp.ne.s32.totalorder %s57, %s60
    %p69 = scmp.eq.s32.totalorder %s17, 1
    %p70 = por %p68, %p69
    %p71 = scmp.ne.s32.totalorder %s60, %s61
    %p72 = scmp.eq.s32.totalorder %s17, 0
    %p73 = por %p71, %p72
    %p74 = scmp.ne.s32.totalorder %s60, %s61
    %p75 = scmp.eq.s32.totalorder %s18, 1
    %p76 = por %p74, %p75
    %p78 = scmp.ne.s32.totalorder %s61, %s77
    %p79 = scmp.eq.s32.totalorder %s18, 0
    %p80 = por %p78, %p79
    %s81 = ssub.s32 %s20, %s27
    %p82 = scmp.eq.s32.totalorder %s81, 0
    %s84 = sadd.s32 %s83, 1
    %s85 = scalar_select %p82, %s83, %s84
    %p88 = pneg %p82
    %p89 = scmp.eq.s32.totalorder %s12, 1
    %p90 = por %p88, %p89
    %p91 = scmp.ne.s32.totalorder %s83, %s86
    %p92 = scmp.eq.s32.totalorder %s12, 0
    %p93 = por %p91, %p92
    %p94 = scmp.ne.s32.totalorder %s83, %s86
    %p95 = scmp.eq.s32.totalorder %s17, 1
    %p96 = por %p94, %p95
    %p97 = scmp.ne.s32.totalorder %s86, %s87
    %p98 = scmp.eq.s32.totalorder %s17, 0
    %p99 = por %p97, %p98
    %p100 = scmp.ne.s32.totalorder %s86, %s87
    %p101 = scmp.eq.s32.totalorder %s18, 1
    %p102 = por %p100, %p101
    %p104 = scmp.ne.s32.totalorder %s87, %s103
    %p105 = scmp.eq.s32.totalorder %s18, 0
    %p106 = por %p104, %p105
    %s108 = sadd.s32 %s107, 1
    %p111 = scmp.eq.s32.totalorder %s12, 1
    %p112 = scmp.ne.s32.totalorder %s107, %s109
    %p113 = scmp.eq.s32.totalorder %s12, 0
    %p114 = por %p112, %p113
    %p115 = scmp.ne.s32.totalorder %s107, %s109
    %p116 = scmp.eq.s32.totalorder %s17, 1
    %p117 = por %p115, %p116
    %p118 = scmp.ne.s32.totalorder %s109, %s110
    %p119 = scmp.eq.s32.totalorder %s17, 0
    %p120 = por %p118, %p119
    %p121 = scmp.ne.s32.totalorder %s109, %s110
    %p122 = scmp.eq.s32.totalorder %s18, 1
    %p123 = por %p121, %p122
    %p125 = scmp.ne.s32.totalorder %s110, %s124
    %p126 = scmp.eq.s32.totalorder %s18, 0
    %p127 = por %p125, %p126
    %s129 = sadd.s32 %s128, 1
    %p132 = scmp.eq.s32.totalorder %s12, 1
    %p133 = scmp.ne.s32.totalorder %s128, %s130
    %p134 = scmp.eq.s32.totalorder %s12, 0
    %p135 = por %p133, %p134
    %p136 = scmp.ne.s32.totalorder %s128, %s130
    %p137 = scmp.eq.s32.totalorder %s17, 1
    %p138 = por %p136, %p137
    %p139 = scmp.ne.s32.totalorder %s130, %s131
    %p140 = scmp.eq.s32.totalorder %s17, 0
    %p141 = por %p139, %p140
    %p142 = scmp.ne.s32.totalorder %s130, %s131
    %p143 = scmp.eq.s32.totalorder %s18, 1
    %p144 = por %p142, %p143
    %p146 = scmp.ne.s32.totalorder %s131, %s145
    %p147 = scmp.eq.s32.totalorder %s18, 0
    %p148 = por %p146, %p147
    %s150 = sadd.s32 %s149, 1
    %p153 = scmp.eq.s32.totalorder %s12, 1
    %p154 = scmp.ne.s32.totalorder %s149, %s151
    %p155 = scmp.eq.s32.totalorder %s12, 0
    %p156 = por %p154, %p155
    %p157 = scmp.ne.s32.totalorder %s149, %s151
    %p158 = scmp.eq.s32.totalorder %s17, 1
    %p159 = por %p157, %p158
    %p160 = scmp.ne.s32.totalorder %s151, %s152
    %p161 = scmp.eq.s32.totalorder %s17, 0
    %p162 = por %p160, %p161
    %p163 = scmp.ne.s32.totalorder %s151, %s152
    %p164 = scmp.eq.s32.totalorder %s18, 1
    %p165 = por %p163, %p164
    %p167 = scmp.ne.s32.totalorder %s152, %s166
    %p168 = scmp.eq.s32.totalorder %s18, 0
    %p169 = por %p167, %p168
    %s170 = ssub.s32 %s19, %s31
    %p171 = scmp.eq.s32.totalorder %s170, 0
    %s173 = sadd.s32 %s172, 1
    %s174 = scalar_select %p171, %s172, %s173
    %p177 = pneg %p171
    %p178 = scmp.eq.s32.totalorder %s12, 1
    %p179 = por %p177, %p178
    %p180 = scmp.ne.s32.totalorder %s172, %s175
    %p181 = scmp.eq.s32.totalorder %s12, 0
    %p182 = por %p180, %p181
    %p183 = scmp.ne.s32.totalorder %s172, %s175
    %p184 = scmp.eq.s32.totalorder %s17, 1
    %p185 = por %p183, %p184
    %p186 = scmp.ne.s32.totalorder %s175, %s176
    %p187 = scmp.eq.s32.totalorder %s17, 0
    %p188 = por %p186, %p187
    %p189 = scmp.ne.s32.totalorder %s175, %s176
    %p190 = scmp.eq.s32.totalorder %s18, 1
    %p191 = por %p189, %p190
    %p193 = scmp.ne.s32.totalorder %s176, %s192
    %p194 = scmp.eq.s32.totalorder %s18, 0
    %p195 = por %p193, %p194
    %p196 = scmp.le.s32.totalorder 1, %s12
    %p197 = scmp.lt.s32.totalorder %s12, 3
    %p198 = pnand %p196, %p197
    %p199 = pneg %p198
    // Predicated region
    $region9: #{tpu_custom_call.1} parent=5 // pred_check
      _
    $region10: #{tpu_custom_call.1} parent=5 // pred_check_branch
      %201 = sbr.rel (%p198) target = $region12
    $region11: #{tpu_custom_call.1} parent=5 // pred_region
      %s202 = ssub.s32 %s12, 1
      // Predicated region
      $region13: #{tpu_custom_call.1} parent=11 // pred_check
        %p203 = pneg %p45
      $region14: #{tpu_custom_call.1} parent=11 // pred_check_branch
        %205 = sbr.rel (%p203) target = $region16
      $region15: #{tpu_custom_call.1} parent=11 // pred_region
        _
      $region16: #{tpu_custom_call.1} parent=11 // pred_fallthru
        _
      // Predicated region
      $region17: #{tpu_custom_call.1} parent=11 // pred_check
        %p206 = pneg %p99
      $region18: #{tpu_custom_call.1} parent=11 // pred_check_branch
        %208 = sbr.rel (%p206) target = $region20
      $region19: #{tpu_custom_call.1} parent=11 // pred_region
        %p209 = scmp.lt.s32.totalorder %s22, 0
        %s210 = scalar_select %p209, %s22, 0
        %s211 = smul.addr %s210, 8
        %s212 = scalar_lea.vmem %s2, %s211
      $region20: #{tpu_custom_call.1} parent=11 // pred_fallthru
        _
      // Predicated region
      $region21: #{tpu_custom_call.1} parent=11 // pred_check
        %p213 = pneg %p120
      $region22: #{tpu_custom_call.1} parent=11 // pred_check_branch
        %215 = sbr.rel (%p213) target = $region24
      $region23: #{tpu_custom_call.1} parent=11 // pred_region
        _
      $region24: #{tpu_custom_call.1} parent=11 // pred_fallthru
        _
      // Predicated region
      $region25: #{tpu_custom_call.1} parent=11 // pred_check
        %p216 = pneg %p141
      $region26: #{tpu_custom_call.1} parent=11 // pred_check_branch
        %218 = sbr.rel (%p216) target = $region28
      $region27: #{tpu_custom_call.1} parent=11 // pred_region
        _
      $region28: #{tpu_custom_call.1} parent=11 // pred_fallthru
        _
      // Predicated region
      $region29: #{tpu_custom_call.1} parent=11 // pred_check
        %p219 = pneg %p162
      $region30: #{tpu_custom_call.1} parent=11 // pred_check_branch
        %221 = sbr.rel (%p219) target = $region32
      $region31: #{tpu_custom_call.1} parent=11 // pred_region
        _
      $region32: #{tpu_custom_call.1} parent=11 // pred_fallthru
        _
    $region12: #{tpu_custom_call.1} parent=5 // pred_fallthru
      _
    %p222 = scmp.lt.s32.totalorder %s12, 2
    // Predicated region
    $region33: #{tpu_custom_call.1} parent=5 // pred_check
      %p223 = pneg %p222
    $region34: #{tpu_custom_call.1} parent=5 // pred_check_branch
      %225 = sbr.rel (%p223) target = $region36
    $region35: #{tpu_custom_call.1} parent=5 // pred_region
      // Predicated region
      $region37: #{tpu_custom_call.1} parent=35 // pred_check
        %p226 = pneg %p67
      $region38: #{tpu_custom_call.1} parent=35 // pred_check_branch
        %228 = sbr.rel (%p226) target = $region40
      $region39: #{tpu_custom_call.1} parent=35 // pred_region
        %s229 = smul.u32 8, %s20
        %p230 = scmp.lt.s32.totalorder %s19, 1
        %s231 = scalar_select %p230, %s19, 1
        %p232 = scmp.lt.s32.totalorder %s229, 7
        %s233 = scalar_select %p232, %s229, 7
        %s234 = smul.addr %s233, 2
        %s235 = smul.addr %s231, 16
        %s236 = sadd.s32 %s234, %s235
        %s237 = smul.addr %s236, 8
        %s238 = scalar_lea.vmem %s1, %s237
        %s239 = smul.u32 8, %s20
      $region40: #{tpu_custom_call.1} parent=35 // pred_fallthru
        _
    $region36: #{tpu_custom_call.1} parent=5 // pred_fallthru
      _
    %p240 = scmp.le.s32.totalorder 1, %s12
    %p241 = scmp.lt.s32.totalorder %s12, 3
    %p242 = pnand %p240, %p241
    %p243 = pneg %p242
    // Predicated region
    $region41: #{tpu_custom_call.1} parent=5 // pred_check
      _
    $region42: #{tpu_custom_call.1} parent=5 // pred_check_branch
      %245 = sbr.rel (%p242) target = $region44
    $region43: #{tpu_custom_call.1} parent=5 // pred_region
      %s246 = ssub.s32 %s12, 1
      %p247 = pneg %p45
      %p248 = pneg %p42
      %s249 = smul.u32 8, %s22
      %p250 = scmp.lt.s32.totalorder %s21, 1
      %s251 = scalar_select %p250, %s21, 1
      %p252 = scmp.lt.s32.totalorder %s249, 7
      %s253 = scalar_select %p252, %s249, 7
      %s254 = smul.addr %s253, 2
      %s255 = smul.addr %s251, 16
      %s256 = sadd.s32 %s254, %s255
      %s257 = smul.addr %s256, 8
      %s258 = scalar_lea.vmem %s1, %s257
      %p259 = pneg %p73
      %p260 = pneg %p70
      %p261 = scmp.lt.s32.totalorder %s22, 0
      %s262 = scalar_select %p261, %s22, 0
      %s263 = smul.addr %s262, 8
      %s264 = scalar_lea.vmem %s2, %s263
      %p265 = pneg %p99
      %p266 = pneg %p96
      %p267 = pneg %p120
      %p268 = pneg %p117
      %p269 = pneg %p141
      %p270 = pneg %p138
      %p271 = pneg %p162
      %p272 = pneg %p159
      %p273 = pneg %p188
      %p274 = pneg %p185
      %p275 = scmp.lt.s32.totalorder %s21, 1
      %s276 = scalar_select %p275, %s21, 1
      %s277 = smul.addr %s276, 8
      %s278 = scalar_lea.vmem %s6, %s277
      %s279 = smul.u32 8, %s22
      %p280 = scmp.lt.s32.totalorder %s21, 1
      %s281 = scalar_select %p280, %s21, 1
      %p282 = scmp.lt.s32.totalorder %s279, 7
      %s283 = scalar_select %p282, %s279, 7
      %s284 = smul.addr %s283, 2
      %s285 = smul.addr %s281, 16
      %s286 = sadd.s32 %s284, %s285
      %s287 = smul.addr %s286, 8
      %s288 = scalar_lea.vmem %s1, %s287
      %s289 = smul.u32 8, %s22
      %p290 = scmp.lt.s32.totalorder %s22, 0
      %s291 = scalar_select %p290, %s22, 0
      %s292 = smul.addr %s291, 8
      %s293 = scalar_lea.vmem %s2, %s292
      %p294 = scmp.lt.s32.totalorder %s21, 1
      %s295 = scalar_select %p294, %s21, 1
      %s296 = smul.addr %s295, 8
      %s297 = scalar_lea.vmem %s6, %s296
      %p298 = scmp.eq.s32.totalorder %s22, 0
      // Predicated region
      $region45: #{tpu_custom_call.1} parent=43 // pred_check
        %p299 = pneg %p298
      $region46: #{tpu_custom_call.1} parent=43 // pred_check_branch
        %301 = sbr.rel (%p299) target = $region48
      $region47: #{tpu_custom_call.1} parent=43 // pred_region
        %vm302 = vcmask 31744
        %303 = vst.msk [vmem:[#allocation2] sm:$0xff] %vm302, 0.0
      $region48: #{tpu_custom_call.1} parent=43 // pred_fallthru
        _
      %v304 = vld [vmem:[%s288] sm:$0xff]
      %v305 = vld [vmem:[%s288 + $0x8] sm:$0xff]
      %v306 = vld [vmem:[%s288 + $0x10] sm:$0xff]
      %v307 = vld [vmem:[%s288 + $0x18] sm:$0xff]
      %v308 = vld [vmem:[%s288 + $0x20] sm:$0xff]
      %v309 = vld [vmem:[%s288 + $0x28] sm:$0xff]
      %v310 = vld [vmem:[%s288 + $0x30] sm:$0xff]
      %v311 = vld [vmem:[%s288 + $0x38] sm:$0xff]
      %v312 = vld [vmem:[%s288 + $0x40] sm:$0xff]
      %v313 = vld [vmem:[%s288 + $0x48] sm:$0xff]
      %v314 = vld [vmem:[%s288 + $0x50] sm:$0xff]
      %v315 = vld [vmem:[%s288 + $0x58] sm:$0xff]
      %v316 = vld [vmem:[%s288 + $0x60] sm:$0xff]
      %v317 = vld [vmem:[%s288 + $0x68] sm:$0xff]
      %v318 = vld [vmem:[%s288 + $0x70] sm:$0xff]
      %v319 = vld [vmem:[%s288 + $0x78] sm:$0xff]
      %v320 = vld [vmem:[%s0] sm:$0xff]
      %v321 = vld [vmem:[%s0 + $0x8] sm:$0xff]
      %v322 = vld [vmem:[%s0 + $0x10] sm:$0xff]
      %v323 = vld [vmem:[%s0 + $0x18] sm:$0xff]
      %v324 = vld [vmem:[%s0 + $0x20] sm:$0xff]
      %v325 = vld [vmem:[%s0 + $0x28] sm:$0xff]
      %v326 = vld [vmem:[%s0 + $0x30] sm:$0xff]
      %v327 = vld [vmem:[%s0 + $0x38] sm:$0xff]
      %v328 = vld [vmem:[%s0 + $0x40] sm:$0xff]
      %v329 = vld [vmem:[%s0 + $0x48] sm:$0xff]
      %v330 = vld [vmem:[%s0 + $0x50] sm:$0xff]
      %v331 = vld [vmem:[%s0 + $0x58] sm:$0xff]
      %v332 = vld [vmem:[%s0 + $0x60] sm:$0xff]
      %v333 = vld [vmem:[%s0 + $0x68] sm:$0xff]
      %v334 = vld [vmem:[%s0 + $0x70] sm:$0xff]
      %v335 = vld [vmem:[%s0 + $0x78] sm:$0xff]
      %v336 = vld [vmem:[%s0 + $0x80] sm:$0xff]
      %v337 = vld [vmem:[%s0 + $0x88] sm:$0xff]
      %v338 = vld [vmem:[%s0 + $0x90] sm:$0xff]
      %v339 = vld [vmem:[%s0 + $0x98] sm:$0xff]
      %v340 = vld [vmem:[%s0 + $0xa0] sm:$0xff]
      %v341 = vld [vmem:[%s0 + $0xa8] sm:$0xff]
      %v342 = vld [vmem:[%s0 + $0xb0] sm:$0xff]
      %v343 = vld [vmem:[%s0 + $0xb8] sm:$0xff]
      %v344 = vld [vmem:[%s0 + $0xc0] sm:$0xff]
      %v345 = vld [vmem:[%s0 + $0xc8] sm:$0xff]
      %v346 = vld [vmem:[%s0 + $0xd0] sm:$0xff]
      %v347 = vld [vmem:[%s0 + $0xd8] sm:$0xff]
      %v348 = vld [vmem:[%s0 + $0xe0] sm:$0xff]
      %v349 = vld [vmem:[%s0 + $0xe8] sm:$0xff]
      %v350 = vld [vmem:[%s0 + $0xf0] sm:$0xff]
      %v351 = vld [vmem:[%s0 + $0xf8] sm:$0xff]
      %352 = vmatprep.subr.mxu0 0.0
      %353 = vmatpush1.msra.mxu0 %v320
      %354 = vmatprep.subr.mxu0 0.0
      %355 = vmatpush1.msra.mxu0 %v321
      %356 = vmatprep.subr.mxu0 0.0
      %357 = vmatpush1.msra.mxu0 %v322
      %358 = vmatprep.subr.mxu0 0.0
      %359 = vmatpush1.msra.mxu0 %v323
      %360 = vmatprep.subr.mxu0 0.0
      %361 = vmatpush1.msra.mxu0 %v324
      %362 = vmatprep.subr.mxu0 0.0
      %363 = vmatpush1.msra.mxu0 %v325
      %364 = vmatprep.subr.mxu0 0.0
      %365 = vmatpush1.msra.mxu0 %v326
      %366 = vmatprep.subr.mxu0 0.0
      %367 = vmatpush1.msra.mxu0 %v327
      %368 = vmatprep.subr.mxu0 0.0
      %369 = vmatpush1.msra.mxu0 %v328
      %370 = vmatprep.subr.mxu0 0.0
      %371 = vmatpush1.msra.mxu0 %v329
      %372 = vmatprep.subr.mxu0 0.0
      %373 = vmatpush1.msra.mxu0 %v330
      %374 = vmatprep.subr.mxu0 0.0
      %375 = vmatpush1.msra.mxu0 %v331
      %376 = vmatprep.subr.mxu0 0.0
      %377 = vmatpush1.msra.mxu0 %v332
      %378 = vmatprep.subr.mxu0 0.0
      %379 = vmatpush1.msra.mxu0 %v333
      %380 = vmatprep.subr.mxu0 0.0
      %381 = vmatpush1.msra.mxu0 %v334
      %382 = vmatprep.subr.mxu0 0.0
      %383 = vmatpush1.msra.mxu0 %v335
      %384 = vmatprep.subr.mxu0 0.0
      %385 = vmatpush1.msra.mxu0 %v336
      %386 = vmatprep.subr.mxu0 0.0
      %387 = vmatpush1.msra.mxu0 %v337
      %388 = vmatprep.subr.mxu0 0.0
      %389 = vmatpush1.msra.mxu0 %v338
      %390 = vmatprep.subr.mxu0 0.0
      %391 = vmatpush1.msra.mxu0 %v339
      %392 = vmatprep.subr.mxu0 0.0
      %393 = vmatpush1.msra.mxu0 %v340
      %394 = vmatprep.subr.mxu0 0.0
      %395 = vmatpush1.msra.mxu0 %v341
      %396 = vmatprep.subr.mxu0 0.0
      %397 = vmatpush1.msra.mxu0 %v342
      %398 = vmatprep.subr.mxu0 0.0
      %399 = vmatpush1.msra.mxu0 %v343
      %400 = vmatprep.subr.mxu0 0.0
      %401 = vmatpush1.msra.mxu0 %v344
      %402 = vmatprep.subr.mxu0 0.0
      %403 = vmatpush1.msra.mxu0 %v345
      %404 = vmatprep.subr.mxu0 0.0
      %405 = vmatpush1.msra.mxu0 %v346
      %406 = vmatprep.subr.mxu0 0.0
      %407 = vmatpush1.msra.mxu0 %v347
      %408 = vmatprep.subr.mxu0 0.0
      %409 = vmatpush1.msra.mxu0 %v348
      %410 = vmatprep.subr.mxu0 0.0
      %411 = vmatpush1.msra.mxu0 %v349
      %412 = vmatprep.subr.mxu0 0.0
      %413 = vmatpush1.msra.mxu0 %v350
      %414 = vmatprep.subr.mxu0 0.0
      %415 = vmatpush1.msra.mxu0 %v351
      %416 = vmatprep.mubr.f32.mxu0 %v305
      %417 = vmatmul.mubr.f32.gmra.mrb[0].mxu0 %v304
      %v418 = vpop.f32.mrb[0].mxu0
      %v419 = vadd.f32 0.0, %v418
      %v420 = vpop.f32.mrb[0].mxu0
      %421 = vmatprep.mubr.f32.mxu0 %v307
      %422 = vmatmul.mubr.f32.gmra.mrb[0].mxu0 %v306
      %v423 = vpop.f32.mrb[0].mxu0
      %v424 = vadd.f32 0.0, %v423
      %v425 = vpop.f32.mrb[0].mxu0
      %426 = vmatprep.mubr.f32.mxu0 %v309
      %427 = vmatmul.mubr.f32.gmra.mrb[0].mxu0 %v308
      %v428 = vpop.f32.mrb[0].mxu0
      %v429 = vadd.f32 0.0, %v428
      %v430 = vpop.f32.mrb[0].mxu0
      %431 = vmatprep.mubr.f32.mxu0 %v311
      %432 = vmatmul.mubr.f32.gmra.mrb[0].mxu0 %v310
      %v433 = vpop.f32.mrb[0].mxu0
      %v434 = vadd.f32 0.0, %v433
      %v435 = vpop.f32.mrb[0].mxu0
      %436 = vmatprep.mubr.f32.mxu0 %v313
      %437 = vmatmul.mubr.f32.gmra.mrb[0].mxu0 %v312
      %v438 = vpop.f32.mrb[0].mxu0
      %v439 = vadd.f32 0.0, %v438
      %v440 = vpop.f32.mrb[0].mxu0
      %441 = vmatprep.mubr.f32.mxu0 %v315
      %442 = vmatmul.mubr.f32.gmra.mrb[0].mxu0 %v314
      %v443 = vpop.f32.mrb[0].mxu0
      %v444 = vadd.f32 0.0, %v443
      %v445 = vpop.f32.mrb[0].mxu0
      %446 = vmatprep.mubr.f32.mxu0 %v317
      %447 = vmatmul.mubr.f32.gmra.mrb[0].mxu0 %v316
      %v448 = vpop.f32.mrb[0].mxu0
      %v449 = vadd.f32 0.0, %v448
      %v450 = vpop.f32.mrb[0].mxu0
      %451 = vmatprep.mubr.f32.mxu0 %v319
      %452 = vmatmul.mubr.f32.gmra.mrb[0].mxu0 %v318
      %v453 = vpop.f32.mrb[0].mxu0
      %v454 = vadd.f32 0.0, %v453
      %v455 = vpop.f32.mrb[0].mxu0
      %456 = vdwg.mxu0
      %v457 = vld [vmem:[#allocation2] sm:$0xff]
      %v458 = vld [vmem:[%s293] sm:$0xff]
      %vm459 = vcmask 523264
      %v461 = vsel %vm459, %v458, 0
      %463 = vmatprep.subr.mxu0 0.0
      %464 = vmatpush1.msra.mxu0 %v419
      %465 = vmatprep.subr.mxu0 0.0
      %466 = vmatpush1.msra.mxu0 %v424
      %467 = vmatprep.subr.mxu0 0.0
      %468 = vmatpush1.msra.mxu0 %v429
      %469 = vmatprep.subr.mxu0 0.0
      %470 = vmatpush1.msra.mxu0 %v434
      %471 = vmatprep.subr.mxu0 0.0
      %472 = vmatpush1.msra.mxu0 %v439
      %473 = vmatprep.subr.mxu0 0.0
      %474 = vmatpush1.msra.mxu0 %v444
      %475 = vmatprep.subr.mxu0 0.0
      %476 = vmatpush1.msra.mxu0 %v449
      %477 = vmatprep.subr.mxu0 0.0
      %478 = vmatpush1.msra.mxu0 %v454
      %479 = vmatprep.subr.mxu0 0.0
      %480 = vmatpush1.msra.mxu0 0.0
      %481 = vmatprep.subr.mxu0 0.0
      %482 = vmatpush1.msra.mxu0 0.0
      %483 = vmatprep.subr.mxu0 0.0
      %484 = vmatpush1.msra.mxu0 0.0
      %485 = vmatprep.subr.mxu0 0.0
      %486 = vmatpush1.msra.mxu0 0.0
      %487 = vmatprep.subr.mxu0 0.0
      %488 = vmatpush1.msra.mxu0 0.0
      %489 = vmatprep.subr.mxu0 0.0
      %490 = vmatpush1.msra.mxu0 0.0
      %491 = vmatprep.subr.mxu0 0.0
      %492 = vmatpush1.msra.mxu0 0.0
      %493 = vmatprep.subr.mxu0 0.0
      %494 = vmatpush1.msra.mxu0 0.0
      %495 = vmatprep.subr.mxu0 0.0
      %496 = vmatpush1.msra.mxu0 0.0
      %497 = vmatprep.subr.mxu0 0.0
      %498 = vmatpush1.msra.mxu0 0.0
      %499 = vmatprep.subr.mxu0 0.0
      %500 = vmatpush1.msra.mxu0 0.0
      %501 = vmatprep.subr.mxu0 0.0
      %502 = vmatpush1.msra.mxu0 0.0
      %503 = vmatprep.subr.mxu0 0.0
      %504 = vmatpush1.msra.mxu0 0.0
      %505 = vmatprep.subr.mxu0 0.0
      %506 = vmatpush1.msra.mxu0 0.0
      %507 = vmatprep.subr.mxu0 0.0
      %508 = vmatpush1.msra.mxu0 0.0
      %509 = vmatprep.subr.mxu0 0.0
      %510 = vmatpush1.msra.mxu0 0.0
      %511 = vmatprep.subr.mxu0 0.0
      %512 = vmatpush1.msra.mxu0 0.0
      %513 = vmatprep.subr.mxu0 0.0
      %514 = vmatpush1.msra.mxu0 0.0
      %515 = vmatprep.subr.mxu0 0.0
      %516 = vmatpush1.msra.mxu0 0.0
      %517 = vmatprep.subr.mxu0 0.0
      %518 = vmatpush1.msra.mxu0 0.0
      %519 = vmatprep.subr.mxu0 0.0
      %520 = vmatpush1.msra.mxu0 0.0
      %521 = vmatprep.subr.mxu0 0.0
      %522 = vmatpush1.msra.mxu0 0.0
      %523 = vmatprep.subr.mxu0 0.0
      %524 = vmatpush1.msra.mxu0 0.0
      %525 = vmatprep.subr.mxu0 0.0
      %526 = vmatpush1.msra.mxu0 0.0
      %527 = vmatprep.mubr.f32.mxu0 0.0
      %528 = vmatmul.mubr.f32.gmra.mrb[0].mxu0 %v461
      %v529 = vpop.f32.mrb[0].mxu0
      %v530 = vadd.f32 0.0, %v529
      %v531 = vpop.f32.mrb[0].mxu0
      %532 = vdwg.mxu0
      %v533 = vadd.f32 %v457, %v530
      %vm534 = vcmask 31744
      %535 = vst.msk [vmem:[#allocation2] sm:$0xff] %vm534, %v533
      // Predicated region
      $region49: #{tpu_custom_call.1} parent=43 // pred_check
        %p536 = pneg %p298
      $region50: #{tpu_custom_call.1} parent=43 // pred_check_branch
        %538 = sbr.rel (%p536) target = $region52
      $region51: #{tpu_custom_call.1} parent=43 // pred_region
        %v539 = vld [vmem:[#allocation2] sm:$0xff]
        %v540 = vld [vmem:[%s3] sm:$0xff]
        %542 = vset.pattern.permute.xlu0 0
        %543 = vperm.xlu0 %542, %v540
        %v544 = vpop.permute.xlu0 %543
        %v546 = vadd.f32 %v539, %v544
        %v547 = vmax.f32 %v546, 0.0
        %v548 = vld [vmem:[%s4] sm:$0xff]
        %v549 = vld [vmem:[%s5] sm:$0xff]
        %551 = vset.pattern.permute.xlu0 0
        %552 = vperm.xlu0 %551, %v549
        %v553 = vpop.permute.xlu0 %552
        %vm555 = vcmask 64512
        %v557 = vsel %vm555, %v548, 0
        %559 = vmatprep.subr.mxu0 0.0
        %560 = vmatpush1.msra.mxu0 %v547
        %561 = vmatprep.subr.mxu0 0.0
        %562 = vmatpush1.msra.mxu0 0.0
        %563 = vmatprep.subr.mxu0 0.0
        %564 = vmatpush1.msra.mxu0 0.0
        %565 = vmatprep.subr.mxu0 0.0
        %566 = vmatpush1.msra.mxu0 0.0
        %567 = vmatprep.subr.mxu0 0.0
        %568 = vmatpush1.msra.mxu0 0.0
        %569 = vmatprep.subr.mxu0 0.0
        %570 = vmatpush1.msra.mxu0 0.0
        %571 = vmatprep.subr.mxu0 0.0
        %572 = vmatpush1.msra.mxu0 0.0
        %573 = vmatprep.subr.mxu0 0.0
        %574 = vmatpush1.msra.mxu0 0.0
        %575 = vmatprep.subr.mxu0 0.0
        %576 = vmatpush1.msra.mxu0 0.0
        %577 = vmatprep.subr.mxu0 0.0
        %578 = vmatpush1.msra.mxu0 0.0
        %579 = vmatprep.subr.mxu0 0.0
        %580 = vmatpush1.msra.mxu0 0.0
        %581 = vmatprep.subr.mxu0 0.0
        %582 = vmatpush1.msra.mxu0 0.0
        %583 = vmatprep.subr.mxu0 0.0
        %584 = vmatpush1.msra.mxu0 0.0
        %585 = vmatprep.subr.mxu0 0.0
        %586 = vmatpush1.msra.mxu0 0.0
        %587 = vmatprep.subr.mxu0 0.0
        %588 = vmatpush1.msra.mxu0 0.0
        %589 = vmatprep.subr.mxu0 0.0
        %590 = vmatpush1.msra.mxu0 0.0
        %591 = vmatprep.subr.mxu0 0.0
        %592 = vmatpush1.msra.mxu0 0.0
        %593 = vmatprep.subr.mxu0 0.0
        %594 = vmatpush1.msra.mxu0 0.0
        %595 = vmatprep.subr.mxu0 0.0
        %596 = vmatpush1.msra.mxu0 0.0
        %597 = vmatprep.subr.mxu0 0.0
        %598 = vmatpush1.msra.mxu0 0.0
        %599 = vmatprep.subr.mxu0 0.0
        %600 = vmatpush1.msra.mxu0 0.0
        %601 = vmatprep.subr.mxu0 0.0
        %602 = vmatpush1.msra.mxu0 0.0
        %603 = vmatprep.subr.mxu0 0.0
        %604 = vmatpush1.msra.mxu0 0.0
        %605 = vmatprep.subr.mxu0 0.0
        %606 = vmatpush1.msra.mxu0 0.0
        %607 = vmatprep.subr.mxu0 0.0
        %608 = vmatpush1.msra.mxu0 0.0
        %609 = vmatprep.subr.mxu0 0.0
        %610 = vmatpush1.msra.mxu0 0.0
        %611 = vmatprep.subr.mxu0 0.0
        %612 = vmatpush1.msra.mxu0 0.0
        %613 = vmatprep.subr.mxu0 0.0
        %614 = vmatpush1.msra.mxu0 0.0
        %615 = vmatprep.subr.mxu0 0.0
        %616 = vmatpush1.msra.mxu0 0.0
        %617 = vmatprep.subr.mxu0 0.0
        %618 = vmatpush1.msra.mxu0 0.0
        %619 = vmatprep.subr.mxu0 0.0
        %620 = vmatpush1.msra.mxu0 0.0
        %621 = vmatprep.subr.mxu0 0.0
        %622 = vmatpush1.msra.mxu0 0.0
        %623 = vmatprep.mubr.f32.mxu0 0.0
        %624 = vmatmul.mubr.f32.gmra.mrb[0].mxu0 %v557
        %v625 = vpop.f32.mrb[0].mxu0
        %v626 = vadd.f32 %v553, %v625
        %v627 = vpop.f32.mrb[0].mxu0
        %628 = vdwg.mxu0
        %629 = vst.msk [vmem:[%s297] sm:$0xff] %vm534, %v626
      $region52: #{tpu_custom_call.1} parent=43 // pred_fallthru
        _
      %p630 = scmp.lt.s32.totalorder %s21, 1
      %s631 = scalar_select %p630, %s21, 1
      %s632 = smul.addr %s631, 8
      %s633 = scalar_lea.vmem %s6, %s632
      // Predicated region
      $region53: #{tpu_custom_call.1} parent=43 // pred_check
        %p634 = pneg %p185
      $region54: #{tpu_custom_call.1} parent=43 // pred_check_branch
        %636 = sbr.rel (%p634) target = $region56
      $region55: #{tpu_custom_call.1} parent=43 // pred_region
        _
      $region56: #{tpu_custom_call.1} parent=43 // pred_fallthru
        _
    $region44: #{tpu_custom_call.1} parent=5 // pred_fallthru
      _
    %p637 = scmp.le.s32.totalorder 2, %s12
    // Predicated region
    $region57: #{tpu_custom_call.1} parent=5 // pred_check
      %p638 = pneg %p637
    $region58: #{tpu_custom_call.1} parent=5 // pred_check_branch
      %640 = sbr.rel (%p638) target = $region60
    $region59: #{tpu_custom_call.1} parent=5 // pred_region
      %s641 = ssub.s32 %s12, 2
      // Predicated region
      $region61: #{tpu_custom_call.1} parent=59 // pred_check
        %p642 = pneg %p191
      $region62: #{tpu_custom_call.1} parent=59 // pred_check_branch
        %644 = sbr.rel (%p642) target = $region64
      $region63: #{tpu_custom_call.1} parent=59 // pred_region
        %p645 = scmp.lt.s32.totalorder %s23, 1
        %s646 = scalar_select %p645, %s23, 1
        %s647 = smul.addr %s646, 8
        %s648 = scalar_lea.vmem %s6, %s647
      $region64: #{tpu_custom_call.1} parent=59 // pred_fallthru
        _
    $region60: #{tpu_custom_call.1} parent=5 // pred_fallthru
      _
  $region6: #{tpu_custom_call.1} parent=0 // loop_footer
    %s16 = sadd.s32 1, %s12
  $region7: #{tpu_custom_call.1} parent=0 // loop_footer_branch
    %11 = sbr.rel target = $region3
  $region8: #{tpu_custom_call.1} parent=0 // loop_exit
    _

</llo_original>
